<compile_context>
chip_gen: v5e
topology: v5e:2x2
jax: 0.10.0
libtpu: 0.0.40
codegen_flags: <defaults>
</compile_context>

<pallas_src>
import jax
import jax.numpy as jnp
from jax.experimental import pallas as pl
from jax.experimental.pallas import tpu as pltpu

_LANES = 128


def _make_dice_kernel(C, smooth):
    def kernel(x_ref, t_ref, o_ref, inter_acc, pred_acc, tgt_acc):
        first = (pl.program_id(0) == 0) & (pl.program_id(1) == 0)
        last = ((pl.program_id(0) == pl.num_programs(0) - 1)
                & (pl.program_id(1) == pl.num_programs(1) - 1))

        @pl.when(first)
        def _():
            inter_acc[...] = jnp.zeros_like(inter_acc)
            pred_acc[...] = jnp.zeros_like(pred_acc)
            tgt_acc[...] = jnp.zeros_like(tgt_acc)

        # pred == (softmax(x)[1] > 0.5)  <=>  sum_{c != 1} exp(x_c - x_1) < 1.0
        x1 = x_ref[0, 1].astype(jnp.float32)            # (R_TILE, 128)
        s = jnp.zeros_like(x1)
        for c in range(C):                              # C is small & static
            if c != 1:
                s = s + jnp.exp(x_ref[0, c].astype(jnp.float32) - x1)
        pred = jnp.where(s < 1.0, 1.0, 0.0)             # strict: matches '> 0.5'
        t = t_ref[0, 0].astype(jnp.float32)             # (R_TILE, 128)

        # vreg-shaped accumulation: elementwise adds only in the hot loop
        inter_acc[...] += pred * t
        pred_acc[...] += pred
        tgt_acc[...] += t

        @pl.when(last)
        def _():
            inter = jnp.sum(inter_acc[...])
            psum = jnp.sum(pred_acc[...])
            tsum = jnp.sum(tgt_acc[...])
            o_ref[0] = (2.0 * inter + smooth) / (psum + tsum + smooth)

    return kernel


def dice_score(inputs, targets, smooth=1.0):
    """inputs, targets: (N, C, H, W). Returns scalar dice (float32)."""
    N, C, H, W = inputs.shape
    assert targets.shape == inputs.shape and C >= 2
    HW = H * W

    x = inputs.reshape(N, C, HW)
    t = targets.reshape(N, C, HW)
    pad = (-HW) % _LANES
    if pad:
        # Zero-padded logits give softmax prob 1/C <= 0.5 for channel 1 (C>=2),
        # so padded pixels contribute 0 to pred, intersection and target sums.
        x = jnp.pad(x, ((0, 0), (0, 0), (0, pad)))
        t = jnp.pad(t, ((0, 0), (0, 0), (0, pad)))
    R = (HW + pad) // _LANES
    x = x.reshape(N, C, R, _LANES)   # contiguous reshape, no transpose
    t = t.reshape(N, C, R, _LANES)

    # Spatial row-tile: big enough to amortize per-step overhead (~0.35us),
    # small enough to stay well under scoped VMEM on v5e/v6e/v7x
    # (logits block at R_TILE=512 is ~1 MiB, ~2 MiB double-buffered).
    if R <= 512:
        r_tile = R
    else:
        r_tile = max((d for d in range(512, 0, -8) if R % d == 0), default=R)
    grid = (N, R // r_tile)

    out = pl.pallas_call(
        _make_dice_kernel(C, float(smooth)),
        out_shape=jax.ShapeDtypeStruct((1,), jnp.float32),
        grid_spec=pltpu.PrefetchScalarGridSpec(
            num_scalar_prefetch=0,
            grid=grid,
            in_specs=[
                # all C channels of the logits for this (batch, spatial) tile
                pl.BlockSpec((1, C, r_tile, _LANES), lambda n, s: (n, 0, s, 0)),
                # channel 1 of the targets read directly via the index_map
                pl.BlockSpec((1, 1, r_tile, _LANES), lambda n, s: (n, 1, s, 0)),
            ],
            out_specs=pl.BlockSpec(memory_space=pltpu.MemorySpace.SMEM),
            scratch_shapes=[
                pltpu.VMEM((r_tile, _LANES), jnp.float32),   # intersection acc
                pltpu.VMEM((r_tile, _LANES), jnp.float32),   # sum(pred) acc
                pltpu.VMEM((r_tile, _LANES), jnp.float32),   # sum(target) acc
            ],
        ),
        compiler_params=pltpu.CompilerParams(
            dimension_semantics=("arbitrary", "arbitrary")),
    )(x, t)
    # TODO(synk): on v7x, split the batch axis across the 2 TensorCores with
    # per-core partial (inter, pred, tgt) outputs combined in the wrapper.
    return out[0]


def _dice_score_ref(inputs, targets, smooth=1.0):
    p = jax.nn.softmax(inputs, axis=1)
    t = targets[:, 1:2, ...]
    pred = jnp.where(p[:, 1:2, ...] > 0.5, 1.0, 0.0)
    pred = pred.reshape(-1)
    t = t.reshape(-1)
    inter = jnp.sum(pred * t)
    return (2.0 * inter + smooth) / (jnp.sum(pred) + jnp.sum(t) + smooth)


if __name__ == "__main__":
    key = jax.random.PRNGKey(0)
    k1, k2 = jax.random.split(key)

    N, C, H, W = 2, 4, 16, 16
    inputs = jax.random.normal(k1, (N, C, H, W), dtype=jnp.float32)
    # one-hot targets: random class per pixel -> one-hot over C, NCHW
    cls = jax.random.randint(k2, (N, H, W), 0, C)
    targets = jax.nn.one_hot(cls, C, axis=1).astype(jnp.float32)  # (N, C, H, W)

    dice = dice_score(inputs, targets, smooth=1.0)
    dice = jax.block_until_ready(dice)

    ref = _dice_score_ref(inputs, targets, smooth=1.0)
    assert jnp.allclose(dice, ref, atol=1e-5, rtol=1e-5), (dice, ref)

    print("KERNEL_OK")
</pallas_src>

<mosaic_0001>
module attributes {stable_mosaic.version = 11 : i64} {
  func.func @kernel(%arg0: i32, %arg1: i32, %arg2: memref<1x4x2x128xf32, #tpu.memory_space<vmem>>, %arg3: memref<1x1x2x128xf32, #tpu.memory_space<vmem>>, %arg4: memref<1xf32, #tpu.memory_space<smem>>, %arg5: memref<2x128xf32, #tpu.memory_space<vmem>>, %arg6: memref<2x128xf32, #tpu.memory_space<vmem>>, %arg7: memref<2x128xf32, #tpu.memory_space<vmem>>) attributes {dimension_semantics = [#tpu.dimension_semantics<arbitrary>, #tpu.dimension_semantics<arbitrary>], iteration_bounds = array<i64: 2, 1>, scalar_prefetch = 0 : i64, scratch_operands = 3 : i64, tpu.core_type = #tpu.core_type<tc>, window_params = [{transform_indices = @transform_0, window_bounds = array<i64: 1, 4, 2, 128>}, {transform_indices = @transform_1, window_bounds = array<i64: 1, 1, 2, 128>}, {transform_indices = @transform_2, window_bounds = array<i64: 1>}]} {
    %c0_i32 = arith.constant 0 : i32
    %0 = arith.cmpi eq, %arg0, %c0_i32 : i32
    %c0_i32_0 = arith.constant 0 : i32
    %1 = arith.cmpi eq, %arg1, %c0_i32_0 : i32
    %2 = arith.andi %0, %1 : i1
    %c1_i32 = arith.constant 1 : i32
    %3 = arith.cmpi eq, %arg0, %c1_i32 : i32
    %c0_i32_1 = arith.constant 0 : i32
    %4 = arith.cmpi eq, %arg1, %c0_i32_1 : i32
    %5 = arith.andi %3, %4 : i1
    %6 = arith.extui %2 : i1 to i32
    %c0_i32_2 = arith.constant 0 : i32
    %7 = arith.cmpi ne, %6, %c0_i32_2 : i32
    scf.if %7 {
      %cst_35 = arith.constant 0.000000e+00 : f32
      %45 = vector.broadcast %cst_35 : f32 to vector<2x128xf32>
      %c0_36 = arith.constant 0 : index
      %c0_37 = arith.constant 0 : index
      %46 = vector.load %arg5[%c0_36, %c0_37] : memref<2x128xf32, #tpu.memory_space<vmem>>, vector<2x128xf32>
      tpu.vector_store %arg5[%c0_36, %c0_37], %45 {strides = array<i32>} : memref<2x128xf32, #tpu.memory_space<vmem>>, vector<2x128xf32>,
      %cst_38 = arith.constant 0.000000e+00 : f32
      %47 = vector.broadcast %cst_38 : f32 to vector<2x128xf32>
      %c0_39 = arith.constant 0 : index
      %c0_40 = arith.constant 0 : index
      %48 = vector.load %arg6[%c0_39, %c0_40] : memref<2x128xf32, #tpu.memory_space<vmem>>, vector<2x128xf32>
      tpu.vector_store %arg6[%c0_39, %c0_40], %47 {strides = array<i32>} : memref<2x128xf32, #tpu.memory_space<vmem>>, vector<2x128xf32>,
      %cst_41 = arith.constant 0.000000e+00 : f32
      %49 = vector.broadcast %cst_41 : f32 to vector<2x128xf32>
      %c0_42 = arith.constant 0 : index
      %c0_43 = arith.constant 0 : index
      %50 = vector.load %arg7[%c0_42, %c0_43] : memref<2x128xf32, #tpu.memory_space<vmem>>, vector<2x128xf32>
      tpu.vector_store %arg7[%c0_42, %c0_43], %49 {strides = array<i32>} : memref<2x128xf32, #tpu.memory_space<vmem>>, vector<2x128xf32>,
    } else {
    }
    %c0 = arith.constant 0 : index
    %c1 = arith.constant 1 : index
    %c0_3 = arith.constant 0 : index
    %c0_4 = arith.constant 0 : index
    %8 = vector.load %arg2[%c0, %c1, %c0_3, %c0_4] : memref<1x4x2x128xf32, #tpu.memory_space<vmem>>, vector<1x1x2x128xf32>
    %9 = vector.shape_cast %8 : vector<1x1x2x128xf32> to vector<2x128xf32>
    %cst = arith.constant 0.000000e+00 : f32
    %10 = vector.broadcast %cst : f32 to vector<2x128xf32>
    %c0_5 = arith.constant 0 : index
    %c0_6 = arith.constant 0 : index
    %c0_7 = arith.constant 0 : index
    %c0_8 = arith.constant 0 : index
    %11 = vector.load %arg2[%c0_5, %c0_6, %c0_7, %c0_8] : memref<1x4x2x128xf32, #tpu.memory_space<vmem>>, vector<1x1x2x128xf32>
    %12 = vector.shape_cast %11 : vector<1x1x2x128xf32> to vector<2x128xf32>
    %13 = arith.subf %12, %9 : vector<2x128xf32>
    %14 = math.exp %13 : vector<2x128xf32>
    %15 = arith.addf %10, %14 : vector<2x128xf32>
    %c0_9 = arith.constant 0 : index
    %c2 = arith.constant 2 : index
    %c0_10 = arith.constant 0 : index
    %c0_11 = arith.constant 0 : index
    %16 = vector.load %arg2[%c0_9, %c2, %c0_10, %c0_11] : memref<1x4x2x128xf32, #tpu.memory_space<vmem>>, vector<1x1x2x128xf32>
    %17 = vector.shape_cast %16 : vector<1x1x2x128xf32> to vector<2x128xf32>
    %18 = arith.subf %17, %9 : vector<2x128xf32>
    %19 = math.exp %18 : vector<2x128xf32>
    %20 = arith.addf %15, %19 : vector<2x128xf32>
    %c0_12 = arith.constant 0 : index
    %c3 = arith.constant 3 : index
    %c0_13 = arith.constant 0 : index
    %c0_14 = arith.constant 0 : index
    %21 = vector.load %arg2[%c0_12, %c3, %c0_13, %c0_14] : memref<1x4x2x128xf32, #tpu.memory_space<vmem>>, vector<1x1x2x128xf32>
    %22 = vector.shape_cast %21 : vector<1x1x2x128xf32> to vector<2x128xf32>
    %23 = arith.subf %22, %9 : vector<2x128xf32>
    %24 = math.exp %23 : vector<2x128xf32>
    %25 = arith.addf %20, %24 : vector<2x128xf32>
    %cst_15 = arith.constant 1.000000e+00 : f32
    %26 = vector.broadcast %cst_15 : f32 to vector<2x128xf32>
    %27 = arith.cmpf olt, %25, %26 : vector<2x128xf32>
    %cst_16 = arith.constant 1.000000e+00 : f32
    %cst_17 = arith.constant 0.000000e+00 : f32
    %28 = vector.broadcast %cst_16 : f32 to vector<2x128xf32>
    %29 = vector.broadcast %cst_17 : f32 to vector<2x128xf32>
    %30 = arith.select %27, %28, %29 : vector<2x128xi1>, vector<2x128xf32>
    %c0_18 = arith.constant 0 : index
    %c0_19 = arith.constant 0 : index
    %c0_20 = arith.constant 0 : index
    %c0_21 = arith.constant 0 : index
    %31 = vector.load %arg3[%c0_18, %c0_19, %c0_20, %c0_21] : memref<1x1x2x128xf32, #tpu.memory_space<vmem>>, vector<1x1x2x128xf32>
    %32 = vector.shape_cast %31 : vector<1x1x2x128xf32> to vector<2x128xf32>
    %c0_22 = arith.constant 0 : index
    %c0_23 = arith.constant 0 : index
    %33 = vector.load %arg5[%c0_22, %c0_23] : memref<2x128xf32, #tpu.memory_space<vmem>>, vector<2x128xf32>
    %34 = arith.mulf %30, %32 : vector<2x128xf32>
    %35 = arith.addf %33, %34 : vector<2x128xf32>
    %c0_24 = arith.constant 0 : index
    %c0_25 = arith.constant 0 : index
    %36 = vector.load %arg5[%c0_24, %c0_25] : memref<2x128xf32, #tpu.memory_space<vmem>>, vector<2x128xf32>
    tpu.vector_store %arg5[%c0_24, %c0_25], %35 {strides = array<i32>} : memref<2x128xf32, #tpu.memory_space<vmem>>, vector<2x128xf32>,
    %c0_26 = arith.constant 0 : index
    %c0_27 = arith.constant 0 : index
    %37 = vector.load %arg6[%c0_26, %c0_27] : memref<2x128xf32, #tpu.memory_space<vmem>>, vector<2x128xf32>
    %38 = arith.addf %37, %30 : vector<2x128xf32>
    %c0_28 = arith.constant 0 : index
    %c0_29 = arith.constant 0 : index
    %39 = vector.load %arg6[%c0_28, %c0_29] : memref<2x128xf32, #tpu.memory_space<vmem>>, vector<2x128xf32>
    tpu.vector_store %arg6[%c0_28, %c0_29], %38 {strides = array<i32>} : memref<2x128xf32, #tpu.memory_space<vmem>>, vector<2x128xf32>,
    %c0_30 = arith.constant 0 : index
    %c0_31 = arith.constant 0 : index
    %40 = vector.load %arg7[%c0_30, %c0_31] : memref<2x128xf32, #tpu.memory_space<vmem>>, vector<2x128xf32>
    %41 = arith.addf %40, %32 : vector<2x128xf32>
    %c0_32 = arith.constant 0 : index
    %c0_33 = arith.constant 0 : index
    %42 = vector.load %arg7[%c0_32, %c0_33] : memref<2x128xf32, #tpu.memory_space<vmem>>, vector<2x128xf32>
    tpu.vector_store %arg7[%c0_32, %c0_33], %41 {strides = array<i32>} : memref<2x128xf32, #tpu.memory_space<vmem>>, vector<2x128xf32>,
    %43 = arith.extui %5 : i1 to i32
    %c0_i32_34 = arith.constant 0 : i32
    %44 = arith.cmpi ne, %43, %c0_i32_34 : i32
    scf.if %44 {
      %c0_35 = arith.constant 0 : index
      %c0_36 = arith.constant 0 : index
      %45 = vector.load %arg5[%c0_35, %c0_36] : memref<2x128xf32, #tpu.memory_space<vmem>>, vector<2x128xf32>
      %46 = vector.shape_cast %45 : vector<2x128xf32> to vector<1x2x128xf32>
      %cst_37 = arith.constant dense<0.000000e+00> : vector<1xf32>
      %47 = vector.multi_reduction <add>, %46, %cst_37 [1, 2] : vector<1x2x128xf32> to vector<1xf32>
      %48 = vector.shape_cast %47 : vector<1xf32> to vector<1x1x1xf32>
      %49 = vector.extract %48[0, 0, 0] : f32 from vector<1x1x1xf32>
      %c0_38 = arith.constant 0 : index
      %c0_39 = arith.constant 0 : index
      %50 = vector.load %arg6[%c0_38, %c0_39] : memref<2x128xf32, #tpu.memory_space<vmem>>, vector<2x128xf32>
      %51 = vector.shape_cast %50 : vector<2x128xf32> to vector<1x2x128xf32>
      %cst_40 = arith.constant dense<0.000000e+00> : vector<1xf32>
      %52 = vector.multi_reduction <add>, %51, %cst_40 [1, 2] : vector<1x2x128xf32> to vector<1xf32>
      %53 = vector.shape_cast %52 : vector<1xf32> to vector<1x1x1xf32>
      %54 = vector.extract %53[0, 0, 0] : f32 from vector<1x1x1xf32>
      %c0_41 = arith.constant 0 : index
      %c0_42 = arith.constant 0 : index
      %55 = vector.load %arg7[%c0_41, %c0_42] : memref<2x128xf32, #tpu.memory_space<vmem>>, vector<2x128xf32>
      %56 = vector.shape_cast %55 : vector<2x128xf32> to vector<1x2x128xf32>
      %cst_43 = arith.constant dense<0.000000e+00> : vector<1xf32>
      %57 = vector.multi_reduction <add>, %56, %cst_43 [1, 2] : vector<1x2x128xf32> to vector<1xf32>
      %58 = vector.shape_cast %57 : vector<1xf32> to vector<1x1x1xf32>
      %59 = vector.extract %58[0, 0, 0] : f32 from vector<1x1x1xf32>
      %cst_44 = arith.constant 2.000000e+00 : f32
      %60 = arith.mulf %cst_44, %49 : f32
      %cst_45 = arith.constant 1.000000e+00 : f32
      %61 = arith.addf %60, %cst_45 : f32
      %62 = arith.addf %54, %59 : f32
      %cst_46 = arith.constant 1.000000e+00 : f32
      %63 = arith.addf %62, %cst_46 : f32
      %64 = arith.divf %61, %63 : f32
      %c0_47 = arith.constant 0 : index
      %65 = memref.load %arg4[%c0_47] : memref<1xf32, #tpu.memory_space<smem>>
      memref.store %64, %arg4[%c0_47] : memref<1xf32, #tpu.memory_space<smem>>
    } else {
    }
    return
  }
  func.func @transform_0(%arg0: i32, %arg1: i32) -> (i32, i32, i32, i32) {
    %c0_i32 = arith.constant 0 : i32
    %c0_i32_0 = arith.constant 0 : i32
    %c0_i32_1 = arith.constant 0 : i32
    return %arg0, %c0_i32, %arg1, %c0_i32_0 : i32, i32, i32, i32
  }
  func.func @transform_1(%arg0: i32, %arg1: i32) -> (i32, i32, i32, i32) {
    %c1_i32 = arith.constant 1 : i32
    %c0_i32 = arith.constant 0 : i32
    %c0_i32_0 = arith.constant 0 : i32
    return %arg0, %c1_i32, %arg1, %c0_i32 : i32, i32, i32, i32
  }
  func.func @transform_2(%arg0: i32, %arg1: i32) -> i32 {
    %c0_i32 = arith.constant 0 : i32
    %c0_i32_0 = arith.constant 0 : i32
    return %c0_i32 : i32
  }
}

</mosaic_0001>

<llo_original>
// kernel: tpu_custom_call.1
$region0: #{tpu_custom_call.1}
  #allocation0 [shape = 'u32[]', space=smem, size = 0x4, offset = 0x4, fixed_abs, tag = 'smem constant byte address 0x4 - core index']
  #allocation1 [shape = 'u32[72,128]{1,0:T(1,128)}', space=vmem, size = 0x9000, scoped, tag = 'internal scratch']
  #allocation2 [shape = 'f32[2,128]{1,0:T(2,128)}', space=vmem, size = 0x400, scoped, tag = 'scratch operand']
  #allocation3 [shape = 'f32[2,128]{1,0:T(2,128)}', space=vmem, size = 0x400, scoped, tag = 'scratch operand']
  #allocation4 [shape = 'f32[2,128]{1,0:T(2,128)}', space=vmem, size = 0x400, scoped, tag = 'scratch operand']
  %s0 = inlined_call_operand.hbm [shape: f32[2,4,2,128], index: 0, kind: input, shape index: {}]
  %s1 = inlined_call_operand.hbm [shape: f32[2,4,2,128], index: 1, kind: input, shape index: {}]
  %s2 = inlined_call_operand.hbm [shape: f32[1], index: 2, kind: output, shape index: {}]
  %s3 = sld [smem:[#allocation0]]
  $region57: #{tpu_custom_call.1} parent=0
    _
  %s5 = ssub.s32 1, %s3
  %s6 = scalar_select 0, %s5, %s3
  $region1: #{tpu_custom_call.1} parent=0
    #allocation5 [shape = 'u8[8192]{0}', space=vmem, size = 0x2000, scoped, tag = 'input window, operand 0']
    #allocation6 [shape = 's32[2]{0}', space=sflag, size = 0x8, scoped, tag = 'scoped memory for tpu_custom_call.1']
    #allocation7 [shape = 's32[2]{0}', space=sflag, size = 0x8, scoped, tag = 'scoped memory for tpu_custom_call.1']
    #allocation8 [shape = 'u8[2048]{0}', space=vmem, size = 0x800, scoped, tag = 'input window, operand 1']
    #allocation9 [shape = 's32[2]{0}', space=sflag, size = 0x8, scoped, tag = 'scoped memory for tpu_custom_call.1']
    #allocation10 [shape = 'u8[512]{0}', space=smem, size = 0x200, scoped, tag = 'output window, operand 0, single buffered']
    %7 = vsyncpa [#allocation6], 0
    %s8 = scalar_lea.sflag [#allocation6], 1
    %9 = vsyncpa %s8, 0
    %10 = vsyncpa [#allocation9], 0
    %s11 = scalar_lea.sflag [#allocation9], 1
    %12 = vsyncpa %s11, 0
    %13 = vsyncpa [#allocation7], 0
    loop: start=0, step=1, limit=4
    $region2: #{tpu_custom_call.1} parent=1 // loop_pre_header
      _
    $region3: #{tpu_custom_call.1} parent=1 // loop_header
      %s15 = sphi 0, %s19
      %p16 = scmp.ge.s32.totalorder %s15, 4
      %s22 = sphi 0, %s34
      %s23 = sphi 0, %s30
      %s24 = sphi 0, %s22
      %s25 = sphi 0, %s23
      %s26 = sphi 0, %s24
      %s27 = sphi 0, %s25
      %s39 = sphi 0, %s41
      %s42 = sphi 0, %s39
      %s43 = sphi 0, %s42
      %s59 = sphi 0, %s43
      %s67 = sphi 0, %s69
      %s70 = sphi 0, %s67
      %s71 = sphi 0, %s70
      %s87 = sphi 0, %s71
      %s91 = sphi 0, %s91
      %s93 = sphi 0, %s91
      %s94 = sphi 0, %s93
      %s108 = sphi 0, %s94
    $region4: #{tpu_custom_call.1} parent=1 // loop_header_branch
      %18 = sbr.rel (%p16) target = $region8
    $region5: #{tpu_custom_call.1} parent=1 // loop_body
      %s20 = ssub.s32 %s15, 1
      %s21 = ssub.s32 %s15, 2
      %s28 = sadd.s32 1, %s23
      %p29 = scmp.ge.s32.totalorder %s28, 1
      %s30 = scalar_select %p29, 0, %s28
      %s31 = sadd.s32 1, %s22
      %s32 = scalar_select %p29, %s31, %s22
      %p33 = scmp.ge.s32.totalorder %s32, 2
      %s34 = scalar_select %p33, 0, %s32
      %s35 = ssub.s32 %s22, %s34
      %s36 = ssub.s32 %s23, %s30
      %s37 = sor.u32 %s35, %s36
      %p38 = scmp.eq.s32.totalorder %s37, 0
      %s40 = sadd.s32 %s39, 1
      %s41 = scalar_select %p38, %s39, %s40
      %p44 = pneg %p38
      %p45 = scmp.eq.s32.totalorder %s15, 1
      %p46 = por %p44, %p45
      %p47 = scmp.ne.s32.totalorder %s39, %s42
      %p48 = scmp.eq.s32.totalorder %s15, 0
      %p49 = por %p47, %p48
      %p50 = scmp.ne.s32.totalorder %s39, %s42
      %p51 = scmp.eq.s32.totalorder %s20, 1
      %p52 = por %p50, %p51
      %p53 = scmp.ne.s32.totalorder %s42, %s43
      %p54 = scmp.eq.s32.totalorder %s20, 0
      %p55 = por %p53, %p54
      %p56 = scmp.ne.s32.totalorder %s42, %s43
      %p57 = scmp.eq.s32.totalorder %s21, 1
      %p58 = por %p56, %p57
      %p60 = scmp.ne.s32.totalorder %s43, %s59
      %p61 = scmp.eq.s32.totalorder %s21, 0
      %p62 = por %p60, %p61
      %s63 = ssub.s32 %s22, %s34
      %s64 = ssub.s32 %s23, %s30
      %s65 = sor.u32 %s63, %s64
      %p66 = scmp.eq.s32.totalorder %s65, 0
      %s68 = sadd.s32 %s67, 1
      %s69 = scalar_select %p66, %s67, %s68
      %p72 = pneg %p66
      %p73 = scmp.eq.s32.totalorder %s15, 1
      %p74 = por %p72, %p73
      %p75 = scmp.ne.s32.totalorder %s67, %s70
      %p76 = scmp.eq.s32.totalorder %s15, 0
      %p77 = por %p75, %p76
      %p78 = scmp.ne.s32.totalorder %s67, %s70
      %p79 = scmp.eq.s32.totalorder %s20, 1
      %p80 = por %p78, %p79
      %p81 = scmp.ne.s32.totalorder %s70, %s71
      %p82 = scmp.eq.s32.totalorder %s20, 0
      %p83 = por %p81, %p82
      %p84 = scmp.ne.s32.totalorder %s70, %s71
      %p85 = scmp.eq.s32.totalorder %s21, 1
      %p86 = por %p84, %p85
      %p88 = scmp.ne.s32.totalorder %s71, %s87
      %p89 = scmp.eq.s32.totalorder %s21, 0
      %p90 = por %p88, %p89
      %s92 = sadd.s32 %s91, 1
      %p95 = scmp.eq.s32.totalorder %s15, 1
      %p96 = scmp.ne.s32.totalorder %s91, %s93
      %p97 = scmp.eq.s32.totalorder %s15, 0
      %p98 = por %p96, %p97
      %p99 = scmp.ne.s32.totalorder %s91, %s93
      %p100 = scmp.eq.s32.totalorder %s20, 1
      %p101 = por %p99, %p100
      %p102 = scmp.ne.s32.totalorder %s93, %s94
      %p103 = scmp.eq.s32.totalorder %s20, 0
      %p104 = por %p102, %p103
      %p105 = scmp.ne.s32.totalorder %s93, %s94
      %p106 = scmp.eq.s32.totalorder %s21, 1
      %p107 = por %p105, %p106
      %p109 = scmp.ne.s32.totalorder %s94, %s108
      %p110 = scmp.eq.s32.totalorder %s21, 0
      %p111 = por %p109, %p110
      %p112 = scmp.le.s32.totalorder 1, %s15
      %p113 = scmp.lt.s32.totalorder %s15, 3
      %p114 = pnand %p112, %p113
      %p115 = pneg %p114
      // Predicated region
      $region9: #{tpu_custom_call.1} parent=5 // pred_check
        _
      $region10: #{tpu_custom_call.1} parent=5 // pred_check_branch
        %117 = sbr.rel (%p114) target = $region12
      $region11: #{tpu_custom_call.1} parent=5 // pred_region
        %s118 = ssub.s32 %s15, 1
      $region12: #{tpu_custom_call.1} parent=5 // pred_fallthru
        _
      %p119 = scmp.lt.s32.totalorder %s15, 2
      // Predicated region
      $region13: #{tpu_custom_call.1} parent=5 // pred_check
        %p120 = pneg %p119
      $region14: #{tpu_custom_call.1} parent=5 // pred_check_branch
        %122 = sbr.rel (%p120) target = $region16
      $region15: #{tpu_custom_call.1} parent=5 // pred_region
        // Predicated region
        $region17: #{tpu_custom_call.1} parent=15 // pred_check
          %p123 = pneg %p49
        $region18: #{tpu_custom_call.1} parent=15 // pred_check_branch
          %125 = sbr.rel (%p123) target = $region20
        $region19: #{tpu_custom_call.1} parent=15 // pred_region
          %s126 = sand.u32 %s39, 1
          %s127 = scalar_lea.sflag [#allocation6], %s126
          %s128 = sand.u32 %s39, 1
          %s129 = smul.addr %s128, 8
          %s130 = scalar_lea.vmem [#allocation5], %s129
          %132 = vsyncadd %s127, 0
          %s133 = smul.addr %s22, 4
          %s134 = sadd.s32 %s23, %s133
          %s135 = smul.addr %s134, 2
          %s136 = scalar_lea.hbm %s0, %s135
          %s137 = sshll.u32 %s136, 4
          %s138 = int_to_ptr.hbm [resolvable:$true] %s137
          %s139 = sshll.u32 %s130, 4
          %s140 = int_to_ptr.vmem [resolvable:$true] %s139
          %145 = dma.hbm_to_vmem [thread:$0]  %s138, 128, %s140, %s127, 32, 32, 2
        $region20: #{tpu_custom_call.1} parent=15 // pred_fallthru
          _
        // Predicated region
        $region21: #{tpu_custom_call.1} parent=15 // pred_check
          %p146 = pneg %p77
        $region22: #{tpu_custom_call.1} parent=15 // pred_check_branch
          %148 = sbr.rel (%p146) target = $region24
        $region23: #{tpu_custom_call.1} parent=15 // pred_region
          %s149 = sand.u32 %s67, 1
          %s150 = scalar_lea.sflag [#allocation9], %s149
          %s151 = sand.u32 %s67, 1
          %s152 = smul.addr %s151, 2
          %s153 = scalar_lea.vmem [#allocation8], %s152
          %155 = vsyncadd %s150, 0
          %s156 = sadd.s32 %s23, 1
          %s157 = smul.addr %s22, 4
          %s158 = sadd.s32 %s156, %s157
          %s159 = smul.addr %s158, 2
          %s160 = scalar_lea.hbm %s1, %s159
          %s162 = sshll.u32 %s160, 4
          %s163 = int_to_ptr.hbm [resolvable:$true] %s162
          %s164 = sshll.u32 %s153, 4
          %s165 = int_to_ptr.vmem [resolvable:$true] %s164
          %167 = dma.hbm_to_vmem [thread:$0]  %s163, 32, %s165, %s150
        $region24: #{tpu_custom_call.1} parent=15 // pred_fallthru
          _
      $region16: #{tpu_custom_call.1} parent=5 // pred_fallthru
        _
      %p168 = scmp.le.s32.totalorder 1, %s15
      %p169 = scmp.lt.s32.totalorder %s15, 3
      %p170 = pnand %p168, %p169
      %p171 = pneg %p170
      // Predicated region
      $region25: #{tpu_custom_call.1} parent=5 // pred_check
        _
      $region26: #{tpu_custom_call.1} parent=5 // pred_check_branch
        %173 = sbr.rel (%p170) target = $region28
      $region27: #{tpu_custom_call.1} parent=5 // pred_region
        %s174 = ssub.s32 %s15, 1
        %s175 = sand.u32 %s42, 1
        %s176 = scalar_lea.sflag [#allocation6], %s175
        %s177 = sand.u32 %s42, 1
        %s178 = smul.addr %s177, 8
        %s179 = scalar_lea.vmem [#allocation5], %s178
        // Predicated region
        $region29: #{tpu_custom_call.1} parent=27 // pred_check
          %p180 = pneg %p55
        $region30: #{tpu_custom_call.1} parent=27 // pred_check_branch
          %182 = sbr.rel (%p180) target = $region32
        $region31: #{tpu_custom_call.1} parent=27 // pred_region
          %184 = dma.done %s176, 128
        $region32: #{tpu_custom_call.1} parent=27 // pred_fallthru
          _
        %s185 = sand.u32 %s70, 1
        %s186 = scalar_lea.sflag [#allocation9], %s185
        %s187 = sand.u32 %s70, 1
        %s188 = smul.addr %s187, 2
        %s189 = scalar_lea.vmem [#allocation8], %s188
        // Predicated region
        $region33: #{tpu_custom_call.1} parent=27 // pred_check
          %p190 = pneg %p83
        $region34: #{tpu_custom_call.1} parent=27 // pred_check_branch
          %192 = sbr.rel (%p190) target = $region36
        $region35: #{tpu_custom_call.1} parent=27 // pred_region
          %194 = dma.done %s186, 32
        $region36: #{tpu_custom_call.1} parent=27 // pred_fallthru
          _
        %s195 = sand.u32 %s42, 1
        %s196 = scalar_lea.sflag [#allocation6], %s195
        %s197 = sand.u32 %s42, 1
        %s198 = smul.addr %s197, 8
        %s199 = scalar_lea.vmem [#allocation5], %s198
        %p200 = pneg %p55
        %p201 = pneg %p52
        %s202 = sand.u32 %s70, 1
        %s203 = scalar_lea.sflag [#allocation9], %s202
        %s204 = sand.u32 %s70, 1
        %s205 = smul.addr %s204, 2
        %s206 = scalar_lea.vmem [#allocation8], %s205
        %p207 = pneg %p83
        %p208 = pneg %p80
        %p209 = pneg %p104
        %p210 = pneg %p101
        %p211 = scmp.eq.s32.totalorder %s24, 0
        %p212 = scmp.eq.s32.totalorder %s25, 0
        %p213 = pnand %p211, %p212
        %p214 = pneg %p213
        %p215 = scmp.eq.s32.totalorder %s24, 1
        %p216 = pnand %p215, %p212
        %p217 = pneg %p216
        // Predicated region
        $region37: #{tpu_custom_call.1} parent=27 // pred_check
          _
        $region38: #{tpu_custom_call.1} parent=27 // pred_check_branch
          %219 = sbr.rel (%p213) target = $region40
        $region39: #{tpu_custom_call.1} parent=27 // pred_region
          %220 = vst [vmem:[#allocation2] sm:$0x3] 0.0
          %221 = vst [vmem:[#allocation3] sm:$0x3] 0.0
          %222 = vst [vmem:[#allocation4] sm:$0x3] 0.0
        $region40: #{tpu_custom_call.1} parent=27 // pred_fallthru
          _
        %s223 = scalar_lea.vmem %s179, 2 [#allocation5]
        %v224 = vld [vmem:[%s223] sm:$0x3]
        %v225 = vld [vmem:[%s179] sm:$0x3]
        %v226 = vsub.f32 %v225, %v224
        %v227 = vmul.f32 %v226, 1.442695
        %v228 = vpow.pop %v227
        %v229 = vadd.f32 %v228, 0.0
        %s230 = scalar_lea.vmem %s179, 4 [#allocation5]
        %v231 = vld [vmem:[%s230] sm:$0x3]
        %v232 = vsub.f32 %v231, %v224
        %v233 = vmul.f32 %v232, 1.442695
        %v234 = vpow.pop %v233
        %v235 = vadd.f32 %v229, %v234
        %s236 = scalar_lea.vmem %s179, 6 [#allocation5]
        %v237 = vld [vmem:[%s236] sm:$0x3]
        %v238 = vsub.f32 %v237, %v224
        %v239 = vmul.f32 %v238, 1.442695
        %v240 = vpow.pop %v239
        %v241 = vadd.f32 %v235, %v240
        %vm242 = vcmp.lt.f32.partialorder %v241, 1.0
        %v243 = vsel %vm242, 1.0, 0.0
        %v244 = vld [vmem:[%s189] sm:$0x3]
        %v245 = vld [vmem:[#allocation2] sm:$0x3]
        %v246 = vmul.f32 %v243, %v244
        %v247 = vadd.f32 %v245, %v246
        %248 = vst [vmem:[#allocation2] sm:$0x3] %v247
        %v249 = vld [vmem:[#allocation3] sm:$0x3]
        %v250 = vadd.f32 %v249, %v243
        %251 = vst [vmem:[#allocation3] sm:$0x3] %v250
        %v252 = vld [vmem:[#allocation4] sm:$0x3]
        %v253 = vadd.f32 %v252, %v244
        %254 = vst [vmem:[#allocation4] sm:$0x3] %v253
        // Predicated region
        $region41: #{tpu_custom_call.1} parent=27 // pred_check
          _
        $region42: #{tpu_custom_call.1} parent=27 // pred_check_branch
          %256 = sbr.rel (%p216) target = $region44
        $region43: #{tpu_custom_call.1} parent=27 // pred_region
          %v257 = vld [vmem:[#allocation2] sm:$0x3]
          %vm258 = vcmask 1041408
          %v259 = vsel %vm258, %v257, 0.0
          %260 = vadd.xlane.f32.xlu0 %v259
          %v261 = vpop.xlane.xlu0 %260
          %v262 = vrot.slane %v261, 4
          %v263 = vadd.f32 %v261, %v262
          %v264 = vrot.slane %v263, 2
          %v265 = vadd.f32 %v263, %v264
          %v266 = vrot.slane %v265, 1
          %v267 = vadd.f32 %v265, %v266
          %s268 = vtos %v267
          %v269 = vld [vmem:[#allocation3] sm:$0x3]
          %v270 = vsel %vm258, %v269, 0.0
          %271 = vadd.xlane.f32.xlu0 %v270
          %v272 = vpop.xlane.xlu0 %271
          %v273 = vrot.slane %v272, 4
          %v274 = vadd.f32 %v272, %v273
          %v275 = vrot.slane %v274, 2
          %v276 = vadd.f32 %v274, %v275
          %v277 = vrot.slane %v276, 1
          %v278 = vadd.f32 %v276, %v277
          %s279 = vtos %v278
          %v280 = vld [vmem:[#allocation4] sm:$0x3]
          %v281 = vsel %vm258, %v280, 0.0
          %282 = vadd.xlane.f32.xlu0 %v281
          %v283 = vpop.xlane.xlu0 %282
          %v284 = vrot.slane %v283, 4
          %v285 = vadd.f32 %v283, %v284
          %v286 = vrot.slane %v285, 2
          %v287 = vadd.f32 %v285, %v286
          %v288 = vrot.slane %v287, 1
          %v289 = vadd.f32 %v287, %v288
          %s290 = vtos %v289
          %s291 = smul.f32 %s268, 2.0
          %s292 = sadd.f32 %s291, 1.0
          %s293 = sadd.f32 %s279, %s290
          %s294 = sadd.f32 %s293, 1.0
          %v295 = vstv %s294
          %v296 = vrcp.pop %v295
          %v297 = vmul.f32 %v295, %v296
          %v298 = vsub.f32 1.0, %v297
          %v299 = vmul.f32 %v296, %v298
          %v300 = vadd.f32 %v296, %v299
          %vm301 = vweird.f32 %v295
          %vm302 = vweird.f32 %v296
          %vm303 = vmor %vm301, %vm302
          %v304 = vsel %vm303, %v296, %v300
          %v305 = vand.u32 2147483647, %v295
          %vm306 = vcmp.eq.f32.partialorder %v305, 8.507059e+37
          %v307 = vand.u32 %v295, 2147483648
          %v308 = vor.u32 1.1754944e-38, %v307
          %v309 = vsel %vm306, %v308, %v304
          %s310 = vtos %v309
          %s311 = smul.f32 %s292, %s310
          %s312 = scalar_lea.smem [#allocation10], 0
          %313 = sst [smem:[%s312]] %s311
        $region44: #{tpu_custom_call.1} parent=27 // pred_fallthru
          _
        // Predicated region
        $region45: #{tpu_custom_call.1} parent=27 // pred_check
          %p314 = pneg %p101
        $region46: #{tpu_custom_call.1} parent=27 // pred_check_branch
          %316 = sbr.rel (%p314) target = $region48
        $region47: #{tpu_custom_call.1} parent=27 // pred_region
          %318 = vsyncadd [#allocation7], 0
          %s320 = sshll.u32 %s2, 4
          %s321 = int_to_ptr.hbm [resolvable:$true] %s320
          %323 = dma.smem_to_hbm [#allocation10], 16, %s321, [#allocation7]
        $region48: #{tpu_custom_call.1} parent=27 // pred_fallthru
          _
        // Predicated region
        $region49: #{tpu_custom_call.1} parent=27 // pred_check
          %p324 = pneg %p101
        $region50: #{tpu_custom_call.1} parent=27 // pred_check_branch
          %326 = sbr.rel (%p324) target = $region52
        $region51: #{tpu_custom_call.1} parent=27 // pred_region
          %328 = dma.done [#allocation7], 16
        $region52: #{tpu_custom_call.1} parent=27 // pred_fallthru
          _
        %329 = sfence
      $region28: #{tpu_custom_call.1} parent=5 // pred_fallthru
        _
      %p330 = scmp.le.s32.totalorder 2, %s15
      // Predicated region
      $region53: #{tpu_custom_call.1} parent=5 // pred_check
        %p331 = pneg %p330
      $region54: #{tpu_custom_call.1} parent=5 // pred_check_branch
        %333 = sbr.rel (%p331) target = $region56
      $region55: #{tpu_custom_call.1} parent=5 // pred_region
        %s334 = ssub.s32 %s15, 2
      $region56: #{tpu_custom_call.1} parent=5 // pred_fallthru
        _
    $region6: #{tpu_custom_call.1} parent=1 // loop_footer
      %s19 = sadd.s32 1, %s15
    $region7: #{tpu_custom_call.1} parent=1 // loop_footer_branch
      %14 = sbr.rel target = $region3
    $region8: #{tpu_custom_call.1} parent=1 // loop_exit
      _
    %335 = vsyncpa [#allocation6], 1
    %s336 = scalar_lea.sflag [#allocation6], 1
    %337 = vsyncpa %s336, 1
    %338 = vsyncpa [#allocation9], 1
    %s339 = scalar_lea.sflag [#allocation9], 1
    %340 = vsyncpa %s339, 1
    %341 = vsyncpa [#allocation7], 1
    %s342 = scalar_lea.sflag [#allocation7], 1
    %343 = vsyncpa %s342, 1

</llo_original>
